<compile_context>
chip_gen: v6e
topology: v6e:2x2x1
jax: 0.10.0
libtpu: 0.0.40
codegen_flags: <defaults>
</compile_context>

<pallas_src>
import functools

import jax
import jax.numpy as jnp
from jax.experimental import pallas as pl
from jax.experimental.pallas import tpu as pltpu


def _shuffle_kernel(x_ref, o_ref, *, groups, cpg, jb):
    # Block: (tb, channels, tf), tf lane-dense.
    # Output rows [j*groups, (j+1)*groups) come from input rows
    # {j, j+cpg, ..., j+(groups-1)*cpg}.  Assemble jb*groups rows per store so
    # each write is a contiguous (ideally >=8-row) sublane-aligned chunk; reads
    # are single rows at static offsets (stride-free, interpreter-safe).
    for j0 in range(0, cpg, jb):
        rows = [
            x_ref[:, pl.ds(g * cpg + j, 1), :]
            for j in range(j0, j0 + jb)
            for g in range(groups)
        ]
        o_ref[:, pl.ds(j0 * groups, jb * groups), :] = jnp.concatenate(rows, axis=1)


def _store_batch(groups, cpg):
    """How many j-indices to merge per store so writes are >=8 rows wide."""
    if groups % 8 == 0:
        return 1
    jb = max(1, -(-8 // groups))  # ceil(8 / groups)
    while jb > 1 and cpg % jb != 0:
        jb -= 1
    return jb


def _vmem_budget_bytes():
    """~75% of physical VMEM; conservative (v7x-sized) if the query fails."""
    try:
        cap = int(pltpu.get_tpu_info().vmem_capacity_bytes)
    except Exception:
        cap = 64 << 20
    return cap, (cap * 3) // 4


def channel_shuffle(x, groups):
    """Pallas channel shuffle.

    Args:
      x: [batch, channels, series, modal] array.
      groups: number of channel groups; channels % groups == 0.
    Returns:
      shuffled array of the same shape/dtype (exact copy permutation).
    """
    batch, channels, series, modal = x.shape
    assert channels % groups == 0
    cpg = channels // groups

    flat = series * modal  # lane-dense trailing axis
    x3 = x.reshape(batch, channels, flat)

    # Pack sub-32-bit dtypes into uint32 lanes: channels is the sublane axis,
    # so 32-bit rows keep the in-VMEM shuffle to plain aligned sublane moves.
    orig_dtype = x3.dtype
    pack = 1
    if orig_dtype.itemsize < 4 and flat % (4 // orig_dtype.itemsize) == 0:
        pack = 4 // orig_dtype.itemsize
        x3 = jax.lax.bitcast_convert_type(
            x3.reshape(batch, channels, flat // pack, pack), jnp.uint32
        )
    work_flat = flat // pack
    itemsize = x3.dtype.itemsize

    # --- block sizing (generation-aware) ------------------------------------
    vmem_cap, vmem_budget = _vmem_budget_bytes()
    base_target = (8 << 20) if vmem_cap >= (100 << 20) else (4 << 20)
    # Never let the double-buffered in+out footprint (~4x block) crowd VMEM.
    target_block = min(base_target, max(1 << 17, (vmem_budget - (4 << 20)) // 4))

    row_bytes = channels * itemsize
    if channels * work_flat * itemsize <= target_block or work_flat < 128:
        tf = work_flat  # full trailing axis (always a legal block dim)
    else:
        tf = max(128, (target_block // row_bytes) // 128 * 128)
    n_ft = pl.cdiv(work_flat, tf)  # cdiv grid: partial last block is masked

    # Fold batch into the block to amortize per-step overhead, but keep >= 2
    # grid steps (when there is work for 2 steps) so both v7x TCs stay busy.
    per_batch_bytes = channels * tf * itemsize
    tb = max(1, min(batch, target_block // max(per_batch_bytes, 1)))
    if tb > 1 and pl.cdiv(batch, tb) * n_ft < 2:
        tb = max(1, -(-batch // 2))
    n_b = pl.cdiv(batch, tb)

    block_bytes = tb * channels * tf * itemsize
    vmem_limit = int(min(max(4 * block_bytes + (4 << 20), 32 << 20), vmem_budget))

    kernel = functools.partial(
        _shuffle_kernel, groups=groups, cpg=cpg, jb=_store_batch(groups, cpg)
    )

    out3 = pl.pallas_call(
        kernel,
        out_shape=jax.ShapeDtypeStruct((batch, channels, work_flat), x3.dtype),
        grid_spec=pltpu.PrefetchScalarGridSpec(
            num_scalar_prefetch=0,
            grid=(n_b, n_ft),
            in_specs=[pl.BlockSpec((tb, channels, tf), lambda b, f: (b, 0, f))],
            out_specs=pl.BlockSpec((tb, channels, tf), lambda b, f: (b, 0, f)),
        ),
        compiler_params=pltpu.CompilerParams(
            dimension_semantics=("parallel", "parallel"),
            vmem_limit_bytes=vmem_limit,
        ),
    )(x3)

    if pack > 1:
        out3 = jax.lax.bitcast_convert_type(out3, orig_dtype).reshape(
            batch, channels, flat
        )
    return out3.reshape(batch, channels, series, modal)


def channel_shuffle_ref(x, groups):
    """Pure-JAX reference mirroring the PyTorch forward exactly."""
    b, c, series, modal = x.shape
    cpg = c // groups
    y = x.reshape(b, groups, cpg, series, modal)
    y = jnp.transpose(y, (0, 2, 1, 3, 4))
    return y.reshape(b, c, series, modal)


if __name__ == "__main__":
    key = jax.random.PRNGKey(0)

    # Matches the first ChannelShuffleModule in ShuffleNet: channels=64, groups=8.
    batch, channels, groups, series, modal = 2, 64, 8, 16, 16
    x = jax.random.normal(key, (batch, channels, series, modal), dtype=jnp.float32)
    out = jax.block_until_ready(channel_shuffle(x, groups))
    ref = channel_shuffle_ref(x, groups)
    assert out.shape == ref.shape and out.dtype == ref.dtype
    assert jnp.array_equal(out, ref), "Pallas channel shuffle mismatch (f32)"

    # Second config (channels=128, groups=8) in bf16 to exercise the uint32
    # lane-packing path.
    x2 = jax.random.normal(key, (2, 128, 8, 9), dtype=jnp.bfloat16)
    out2 = jax.block_until_ready(channel_shuffle(x2, 8))
    ref2 = channel_shuffle_ref(x2, 8)
    assert out2.shape == ref2.shape and out2.dtype == ref2.dtype
    assert jnp.array_equal(out2, ref2), "Pallas channel shuffle mismatch (bf16)"

    print("KERNEL_OK")
</pallas_src>

<mosaic_0001>
module attributes {stable_mosaic.version = 11 : i64} {
  func.func @_shuffle_kernel(%arg0: i32, %arg1: i32, %arg2: memref<1x64x256xf32, #tpu.memory_space<vmem>>, %arg3: memref<1x64x256xf32, #tpu.memory_space<vmem>>) attributes {dimension_semantics = [#tpu.dimension_semantics<parallel>, #tpu.dimension_semantics<parallel>], iteration_bounds = array<i64: 2, 1>, scalar_prefetch = 0 : i64, scratch_operands = 0 : i64, tpu.core_type = #tpu.core_type<tc>, window_params = [{transform_indices = @transform_0, window_bounds = array<i64: 1, 64, 256>}, {transform_indices = @transform_1, window_bounds = array<i64: 1, 64, 256>}]} {
    %c0 = arith.constant 0 : index
    %c0_0 = arith.constant 0 : index
    %c0_1 = arith.constant 0 : index
    %0 = vector.load %arg2[%c0, %c0_0, %c0_1] : memref<1x64x256xf32, #tpu.memory_space<vmem>>, vector<1x1x256xf32>
    %c0_2 = arith.constant 0 : index
    %c8 = arith.constant 8 : index
    %c0_3 = arith.constant 0 : index
    %1 = vector.load %arg2[%c0_2, %c8, %c0_3] : memref<1x64x256xf32, #tpu.memory_space<vmem>>, vector<1x1x256xf32>
    %c0_4 = arith.constant 0 : index
    %c16 = arith.constant 16 : index
    %c0_5 = arith.constant 0 : index
    %2 = vector.load %arg2[%c0_4, %c16, %c0_5] : memref<1x64x256xf32, #tpu.memory_space<vmem>>, vector<1x1x256xf32>
    %c0_6 = arith.constant 0 : index
    %c24 = arith.constant 24 : index
    %c0_7 = arith.constant 0 : index
    %3 = vector.load %arg2[%c0_6, %c24, %c0_7] : memref<1x64x256xf32, #tpu.memory_space<vmem>>, vector<1x1x256xf32>
    %c0_8 = arith.constant 0 : index
    %c32 = arith.constant 32 : index
    %c0_9 = arith.constant 0 : index
    %4 = vector.load %arg2[%c0_8, %c32, %c0_9] : memref<1x64x256xf32, #tpu.memory_space<vmem>>, vector<1x1x256xf32>
    %c0_10 = arith.constant 0 : index
    %c40 = arith.constant 40 : index
    %c0_11 = arith.constant 0 : index
    %5 = vector.load %arg2[%c0_10, %c40, %c0_11] : memref<1x64x256xf32, #tpu.memory_space<vmem>>, vector<1x1x256xf32>
    %c0_12 = arith.constant 0 : index
    %c48 = arith.constant 48 : index
    %c0_13 = arith.constant 0 : index
    %6 = vector.load %arg2[%c0_12, %c48, %c0_13] : memref<1x64x256xf32, #tpu.memory_space<vmem>>, vector<1x1x256xf32>
    %c0_14 = arith.constant 0 : index
    %c56 = arith.constant 56 : index
    %c0_15 = arith.constant 0 : index
    %7 = vector.load %arg2[%c0_14, %c56, %c0_15] : memref<1x64x256xf32, #tpu.memory_space<vmem>>, vector<1x1x256xf32>
    %8 = tpu.concatenate %0, %1, %2, %3, %4, %5, %6, %7 in 1 : vector<1x1x256xf32>, vector<1x1x256xf32>, vector<1x1x256xf32>, vector<1x1x256xf32>, vector<1x1x256xf32>, vector<1x1x256xf32>, vector<1x1x256xf32>, vector<1x1x256xf32> -> vector<1x8x256xf32>
    %c0_16 = arith.constant 0 : index
    %c0_17 = arith.constant 0 : index
    %c0_18 = arith.constant 0 : index
    %9 = vector.load %arg3[%c0_16, %c0_17, %c0_18] : memref<1x64x256xf32, #tpu.memory_space<vmem>>, vector<1x8x256xf32>
    tpu.vector_store %arg3[%c0_16, %c0_17, %c0_18], %8 {strides = array<i32>} : memref<1x64x256xf32, #tpu.memory_space<vmem>>, vector<1x8x256xf32>,
    %c0_19 = arith.constant 0 : index
    %c1 = arith.constant 1 : index
    %c0_20 = arith.constant 0 : index
    %10 = vector.load %arg2[%c0_19, %c1, %c0_20] : memref<1x64x256xf32, #tpu.memory_space<vmem>>, vector<1x1x256xf32>
    %c0_21 = arith.constant 0 : index
    %c9 = arith.constant 9 : index
    %c0_22 = arith.constant 0 : index
    %11 = vector.load %arg2[%c0_21, %c9, %c0_22] : memref<1x64x256xf32, #tpu.memory_space<vmem>>, vector<1x1x256xf32>
    %c0_23 = arith.constant 0 : index
    %c17 = arith.constant 17 : index
    %c0_24 = arith.constant 0 : index
    %12 = vector.load %arg2[%c0_23, %c17, %c0_24] : memref<1x64x256xf32, #tpu.memory_space<vmem>>, vector<1x1x256xf32>
    %c0_25 = arith.constant 0 : index
    %c25 = arith.constant 25 : index
    %c0_26 = arith.constant 0 : index
    %13 = vector.load %arg2[%c0_25, %c25, %c0_26] : memref<1x64x256xf32, #tpu.memory_space<vmem>>, vector<1x1x256xf32>
    %c0_27 = arith.constant 0 : index
    %c33 = arith.constant 33 : index
    %c0_28 = arith.constant 0 : index
    %14 = vector.load %arg2[%c0_27, %c33, %c0_28] : memref<1x64x256xf32, #tpu.memory_space<vmem>>, vector<1x1x256xf32>
    %c0_29 = arith.constant 0 : index
    %c41 = arith.constant 41 : index
    %c0_30 = arith.constant 0 : index
    %15 = vector.load %arg2[%c0_29, %c41, %c0_30] : memref<1x64x256xf32, #tpu.memory_space<vmem>>, vector<1x1x256xf32>
    %c0_31 = arith.constant 0 : index
    %c49 = arith.constant 49 : index
    %c0_32 = arith.constant 0 : index
    %16 = vector.load %arg2[%c0_31, %c49, %c0_32] : memref<1x64x256xf32, #tpu.memory_space<vmem>>, vector<1x1x256xf32>
    %c0_33 = arith.constant 0 : index
    %c57 = arith.constant 57 : index
    %c0_34 = arith.constant 0 : index
    %17 = vector.load %arg2[%c0_33, %c57, %c0_34] : memref<1x64x256xf32, #tpu.memory_space<vmem>>, vector<1x1x256xf32>
    %18 = tpu.concatenate %10, %11, %12, %13, %14, %15, %16, %17 in 1 : vector<1x1x256xf32>, vector<1x1x256xf32>, vector<1x1x256xf32>, vector<1x1x256xf32>, vector<1x1x256xf32>, vector<1x1x256xf32>, vector<1x1x256xf32>, vector<1x1x256xf32> -> vector<1x8x256xf32>
    %c0_35 = arith.constant 0 : index
    %c8_36 = arith.constant 8 : index
    %c0_37 = arith.constant 0 : index
    %19 = vector.load %arg3[%c0_35, %c8_36, %c0_37] : memref<1x64x256xf32, #tpu.memory_space<vmem>>, vector<1x8x256xf32>
    tpu.vector_store %arg3[%c0_35, %c8_36, %c0_37], %18 {strides = array<i32>} : memref<1x64x256xf32, #tpu.memory_space<vmem>>, vector<1x8x256xf32>,
    %c0_38 = arith.constant 0 : index
    %c2 = arith.constant 2 : index
    %c0_39 = arith.constant 0 : index
    %20 = vector.load %arg2[%c0_38, %c2, %c0_39] : memref<1x64x256xf32, #tpu.memory_space<vmem>>, vector<1x1x256xf32>
    %c0_40 = arith.constant 0 : index
    %c10 = arith.constant 10 : index
    %c0_41 = arith.constant 0 : index
    %21 = vector.load %arg2[%c0_40, %c10, %c0_41] : memref<1x64x256xf32, #tpu.memory_space<vmem>>, vector<1x1x256xf32>
    %c0_42 = arith.constant 0 : index
    %c18 = arith.constant 18 : index
    %c0_43 = arith.constant 0 : index
    %22 = vector.load %arg2[%c0_42, %c18, %c0_43] : memref<1x64x256xf32, #tpu.memory_space<vmem>>, vector<1x1x256xf32>
    %c0_44 = arith.constant 0 : index
    %c26 = arith.constant 26 : index
    %c0_45 = arith.constant 0 : index
    %23 = vector.load %arg2[%c0_44, %c26, %c0_45] : memref<1x64x256xf32, #tpu.memory_space<vmem>>, vector<1x1x256xf32>
    %c0_46 = arith.constant 0 : index
    %c34 = arith.constant 34 : index
    %c0_47 = arith.constant 0 : index
    %24 = vector.load %arg2[%c0_46, %c34, %c0_47] : memref<1x64x256xf32, #tpu.memory_space<vmem>>, vector<1x1x256xf32>
    %c0_48 = arith.constant 0 : index
    %c42 = arith.constant 42 : index
    %c0_49 = arith.constant 0 : index
    %25 = vector.load %arg2[%c0_48, %c42, %c0_49] : memref<1x64x256xf32, #tpu.memory_space<vmem>>, vector<1x1x256xf32>
    %c0_50 = arith.constant 0 : index
    %c50 = arith.constant 50 : index
    %c0_51 = arith.constant 0 : index
    %26 = vector.load %arg2[%c0_50, %c50, %c0_51] : memref<1x64x256xf32, #tpu.memory_space<vmem>>, vector<1x1x256xf32>
    %c0_52 = arith.constant 0 : index
    %c58 = arith.constant 58 : index
    %c0_53 = arith.constant 0 : index
    %27 = vector.load %arg2[%c0_52, %c58, %c0_53] : memref<1x64x256xf32, #tpu.memory_space<vmem>>, vector<1x1x256xf32>
    %28 = tpu.concatenate %20, %21, %22, %23, %24, %25, %26, %27 in 1 : vector<1x1x256xf32>, vector<1x1x256xf32>, vector<1x1x256xf32>, vector<1x1x256xf32>, vector<1x1x256xf32>, vector<1x1x256xf32>, vector<1x1x256xf32>, vector<1x1x256xf32> -> vector<1x8x256xf32>
    %c0_54 = arith.constant 0 : index
    %c16_55 = arith.constant 16 : index
    %c0_56 = arith.constant 0 : index
    %29 = vector.load %arg3[%c0_54, %c16_55, %c0_56] : memref<1x64x256xf32, #tpu.memory_space<vmem>>, vector<1x8x256xf32>
    tpu.vector_store %arg3[%c0_54, %c16_55, %c0_56], %28 {strides = array<i32>} : memref<1x64x256xf32, #tpu.memory_space<vmem>>, vector<1x8x256xf32>,
    %c0_57 = arith.constant 0 : index
    %c3 = arith.constant 3 : index
    %c0_58 = arith.constant 0 : index
    %30 = vector.load %arg2[%c0_57, %c3, %c0_58] : memref<1x64x256xf32, #tpu.memory_space<vmem>>, vector<1x1x256xf32>
    %c0_59 = arith.constant 0 : index
    %c11 = arith.constant 11 : index
    %c0_60 = arith.constant 0 : index
    %31 = vector.load %arg2[%c0_59, %c11, %c0_60] : memref<1x64x256xf32, #tpu.memory_space<vmem>>, vector<1x1x256xf32>
    %c0_61 = arith.constant 0 : index
    %c19 = arith.constant 19 : index
    %c0_62 = arith.constant 0 : index
    %32 = vector.load %arg2[%c0_61, %c19, %c0_62] : memref<1x64x256xf32, #tpu.memory_space<vmem>>, vector<1x1x256xf32>
    %c0_63 = arith.constant 0 : index
    %c27 = arith.constant 27 : index
    %c0_64 = arith.constant 0 : index
    %33 = vector.load %arg2[%c0_63, %c27, %c0_64] : memref<1x64x256xf32, #tpu.memory_space<vmem>>, vector<1x1x256xf32>
    %c0_65 = arith.constant 0 : index
    %c35 = arith.constant 35 : index
    %c0_66 = arith.constant 0 : index
    %34 = vector.load %arg2[%c0_65, %c35, %c0_66] : memref<1x64x256xf32, #tpu.memory_space<vmem>>, vector<1x1x256xf32>
    %c0_67 = arith.constant 0 : index
    %c43 = arith.constant 43 : index
    %c0_68 = arith.constant 0 : index
    %35 = vector.load %arg2[%c0_67, %c43, %c0_68] : memref<1x64x256xf32, #tpu.memory_space<vmem>>, vector<1x1x256xf32>
    %c0_69 = arith.constant 0 : index
    %c51 = arith.constant 51 : index
    %c0_70 = arith.constant 0 : index
    %36 = vector.load %arg2[%c0_69, %c51, %c0_70] : memref<1x64x256xf32, #tpu.memory_space<vmem>>, vector<1x1x256xf32>
    %c0_71 = arith.constant 0 : index
    %c59 = arith.constant 59 : index
    %c0_72 = arith.constant 0 : index
    %37 = vector.load %arg2[%c0_71, %c59, %c0_72] : memref<1x64x256xf32, #tpu.memory_space<vmem>>, vector<1x1x256xf32>
    %38 = tpu.concatenate %30, %31, %32, %33, %34, %35, %36, %37 in 1 : vector<1x1x256xf32>, vector<1x1x256xf32>, vector<1x1x256xf32>, vector<1x1x256xf32>, vector<1x1x256xf32>, vector<1x1x256xf32>, vector<1x1x256xf32>, vector<1x1x256xf32> -> vector<1x8x256xf32>
    %c0_73 = arith.constant 0 : index
    %c24_74 = arith.constant 24 : index
    %c0_75 = arith.constant 0 : index
    %39 = vector.load %arg3[%c0_73, %c24_74, %c0_75] : memref<1x64x256xf32, #tpu.memory_space<vmem>>, vector<1x8x256xf32>
    tpu.vector_store %arg3[%c0_73, %c24_74, %c0_75], %38 {strides = array<i32>} : memref<1x64x256xf32, #tpu.memory_space<vmem>>, vector<1x8x256xf32>,
    %c0_76 = arith.constant 0 : index
    %c4 = arith.constant 4 : index
    %c0_77 = arith.constant 0 : index
    %40 = vector.load %arg2[%c0_76, %c4, %c0_77] : memref<1x64x256xf32, #tpu.memory_space<vmem>>, vector<1x1x256xf32>
    %c0_78 = arith.constant 0 : index
    %c12 = arith.constant 12 : index
    %c0_79 = arith.constant 0 : index
    %41 = vector.load %arg2[%c0_78, %c12, %c0_79] : memref<1x64x256xf32, #tpu.memory_space<vmem>>, vector<1x1x256xf32>
    %c0_80 = arith.constant 0 : index
    %c20 = arith.constant 20 : index
    %c0_81 = arith.constant 0 : index
    %42 = vector.load %arg2[%c0_80, %c20, %c0_81] : memref<1x64x256xf32, #tpu.memory_space<vmem>>, vector<1x1x256xf32>
    %c0_82 = arith.constant 0 : index
    %c28 = arith.constant 28 : index
    %c0_83 = arith.constant 0 : index
    %43 = vector.load %arg2[%c0_82, %c28, %c0_83] : memref<1x64x256xf32, #tpu.memory_space<vmem>>, vector<1x1x256xf32>
    %c0_84 = arith.constant 0 : index
    %c36 = arith.constant 36 : index
    %c0_85 = arith.constant 0 : index
    %44 = vector.load %arg2[%c0_84, %c36, %c0_85] : memref<1x64x256xf32, #tpu.memory_space<vmem>>, vector<1x1x256xf32>
    %c0_86 = arith.constant 0 : index
    %c44 = arith.constant 44 : index
    %c0_87 = arith.constant 0 : index
    %45 = vector.load %arg2[%c0_86, %c44, %c0_87] : memref<1x64x256xf32, #tpu.memory_space<vmem>>, vector<1x1x256xf32>
    %c0_88 = arith.constant 0 : index
    %c52 = arith.constant 52 : index
    %c0_89 = arith.constant 0 : index
    %46 = vector.load %arg2[%c0_88, %c52, %c0_89] : memref<1x64x256xf32, #tpu.memory_space<vmem>>, vector<1x1x256xf32>
    %c0_90 = arith.constant 0 : index
    %c60 = arith.constant 60 : index
    %c0_91 = arith.constant 0 : index
    %47 = vector.load %arg2[%c0_90, %c60, %c0_91] : memref<1x64x256xf32, #tpu.memory_space<vmem>>, vector<1x1x256xf32>
    %48 = tpu.concatenate %40, %41, %42, %43, %44, %45, %46, %47 in 1 : vector<1x1x256xf32>, vector<1x1x256xf32>, vector<1x1x256xf32>, vector<1x1x256xf32>, vector<1x1x256xf32>, vector<1x1x256xf32>, vector<1x1x256xf32>, vector<1x1x256xf32> -> vector<1x8x256xf32>
    %c0_92 = arith.constant 0 : index
    %c32_93 = arith.constant 32 : index
    %c0_94 = arith.constant 0 : index
    %49 = vector.load %arg3[%c0_92, %c32_93, %c0_94] : memref<1x64x256xf32, #tpu.memory_space<vmem>>, vector<1x8x256xf32>
    tpu.vector_store %arg3[%c0_92, %c32_93, %c0_94], %48 {strides = array<i32>} : memref<1x64x256xf32, #tpu.memory_space<vmem>>, vector<1x8x256xf32>,
    %c0_95 = arith.constant 0 : index
    %c5 = arith.constant 5 : index
    %c0_96 = arith.constant 0 : index
    %50 = vector.load %arg2[%c0_95, %c5, %c0_96] : memref<1x64x256xf32, #tpu.memory_space<vmem>>, vector<1x1x256xf32>
    %c0_97 = arith.constant 0 : index
    %c13 = arith.constant 13 : index
    %c0_98 = arith.constant 0 : index
    %51 = vector.load %arg2[%c0_97, %c13, %c0_98] : memref<1x64x256xf32, #tpu.memory_space<vmem>>, vector<1x1x256xf32>
    %c0_99 = arith.constant 0 : index
    %c21 = arith.constant 21 : index
    %c0_100 = arith.constant 0 : index
    %52 = vector.load %arg2[%c0_99, %c21, %c0_100] : memref<1x64x256xf32, #tpu.memory_space<vmem>>, vector<1x1x256xf32>
    %c0_101 = arith.constant 0 : index
    %c29 = arith.constant 29 : index
    %c0_102 = arith.constant 0 : index
    %53 = vector.load %arg2[%c0_101, %c29, %c0_102] : memref<1x64x256xf32, #tpu.memory_space<vmem>>, vector<1x1x256xf32>
    %c0_103 = arith.constant 0 : index
    %c37 = arith.constant 37 : index
    %c0_104 = arith.constant 0 : index
    %54 = vector.load %arg2[%c0_103, %c37, %c0_104] : memref<1x64x256xf32, #tpu.memory_space<vmem>>, vector<1x1x256xf32>
    %c0_105 = arith.constant 0 : index
    %c45 = arith.constant 45 : index
    %c0_106 = arith.constant 0 : index
    %55 = vector.load %arg2[%c0_105, %c45, %c0_106] : memref<1x64x256xf32, #tpu.memory_space<vmem>>, vector<1x1x256xf32>
    %c0_107 = arith.constant 0 : index
    %c53 = arith.constant 53 : index
    %c0_108 = arith.constant 0 : index
    %56 = vector.load %arg2[%c0_107, %c53, %c0_108] : memref<1x64x256xf32, #tpu.memory_space<vmem>>, vector<1x1x256xf32>
    %c0_109 = arith.constant 0 : index
    %c61 = arith.constant 61 : index
    %c0_110 = arith.constant 0 : index
    %57 = vector.load %arg2[%c0_109, %c61, %c0_110] : memref<1x64x256xf32, #tpu.memory_space<vmem>>, vector<1x1x256xf32>
    %58 = tpu.concatenate %50, %51, %52, %53, %54, %55, %56, %57 in 1 : vector<1x1x256xf32>, vector<1x1x256xf32>, vector<1x1x256xf32>, vector<1x1x256xf32>, vector<1x1x256xf32>, vector<1x1x256xf32>, vector<1x1x256xf32>, vector<1x1x256xf32> -> vector<1x8x256xf32>
    %c0_111 = arith.constant 0 : index
    %c40_112 = arith.constant 40 : index
    %c0_113 = arith.constant 0 : index
    %59 = vector.load %arg3[%c0_111, %c40_112, %c0_113] : memref<1x64x256xf32, #tpu.memory_space<vmem>>, vector<1x8x256xf32>
    tpu.vector_store %arg3[%c0_111, %c40_112, %c0_113], %58 {strides = array<i32>} : memref<1x64x256xf32, #tpu.memory_space<vmem>>, vector<1x8x256xf32>,
    %c0_114 = arith.constant 0 : index
    %c6 = arith.constant 6 : index
    %c0_115 = arith.constant 0 : index
    %60 = vector.load %arg2[%c0_114, %c6, %c0_115] : memref<1x64x256xf32, #tpu.memory_space<vmem>>, vector<1x1x256xf32>
    %c0_116 = arith.constant 0 : index
    %c14 = arith.constant 14 : index
    %c0_117 = arith.constant 0 : index
    %61 = vector.load %arg2[%c0_116, %c14, %c0_117] : memref<1x64x256xf32, #tpu.memory_space<vmem>>, vector<1x1x256xf32>
    %c0_118 = arith.constant 0 : index
    %c22 = arith.constant 22 : index
    %c0_119 = arith.constant 0 : index
    %62 = vector.load %arg2[%c0_118, %c22, %c0_119] : memref<1x64x256xf32, #tpu.memory_space<vmem>>, vector<1x1x256xf32>
    %c0_120 = arith.constant 0 : index
    %c30 = arith.constant 30 : index
    %c0_121 = arith.constant 0 : index
    %63 = vector.load %arg2[%c0_120, %c30, %c0_121] : memref<1x64x256xf32, #tpu.memory_space<vmem>>, vector<1x1x256xf32>
    %c0_122 = arith.constant 0 : index
    %c38 = arith.constant 38 : index
    %c0_123 = arith.constant 0 : index
    %64 = vector.load %arg2[%c0_122, %c38, %c0_123] : memref<1x64x256xf32, #tpu.memory_space<vmem>>, vector<1x1x256xf32>
    %c0_124 = arith.constant 0 : index
    %c46 = arith.constant 46 : index
    %c0_125 = arith.constant 0 : index
    %65 = vector.load %arg2[%c0_124, %c46, %c0_125] : memref<1x64x256xf32, #tpu.memory_space<vmem>>, vector<1x1x256xf32>
    %c0_126 = arith.constant 0 : index
    %c54 = arith.constant 54 : index
    %c0_127 = arith.constant 0 : index
    %66 = vector.load %arg2[%c0_126, %c54, %c0_127] : memref<1x64x256xf32, #tpu.memory_space<vmem>>, vector<1x1x256xf32>
    %c0_128 = arith.constant 0 : index
    %c62 = arith.constant 62 : index
    %c0_129 = arith.constant 0 : index
    %67 = vector.load %arg2[%c0_128, %c62, %c0_129] : memref<1x64x256xf32, #tpu.memory_space<vmem>>, vector<1x1x256xf32>
    %68 = tpu.concatenate %60, %61, %62, %63, %64, %65, %66, %67 in 1 : vector<1x1x256xf32>, vector<1x1x256xf32>, vector<1x1x256xf32>, vector<1x1x256xf32>, vector<1x1x256xf32>, vector<1x1x256xf32>, vector<1x1x256xf32>, vector<1x1x256xf32> -> vector<1x8x256xf32>
    %c0_130 = arith.constant 0 : index
    %c48_131 = arith.constant 48 : index
    %c0_132 = arith.constant 0 : index
    %69 = vector.load %arg3[%c0_130, %c48_131, %c0_132] : memref<1x64x256xf32, #tpu.memory_space<vmem>>, vector<1x8x256xf32>
    tpu.vector_store %arg3[%c0_130, %c48_131, %c0_132], %68 {strides = array<i32>} : memref<1x64x256xf32, #tpu.memory_space<vmem>>, vector<1x8x256xf32>,
    %c0_133 = arith.constant 0 : index
    %c7 = arith.constant 7 : index
    %c0_134 = arith.constant 0 : index
    %70 = vector.load %arg2[%c0_133, %c7, %c0_134] : memref<1x64x256xf32, #tpu.memory_space<vmem>>, vector<1x1x256xf32>
    %c0_135 = arith.constant 0 : index
    %c15 = arith.constant 15 : index
    %c0_136 = arith.constant 0 : index
    %71 = vector.load %arg2[%c0_135, %c15, %c0_136] : memref<1x64x256xf32, #tpu.memory_space<vmem>>, vector<1x1x256xf32>
    %c0_137 = arith.constant 0 : index
    %c23 = arith.constant 23 : index
    %c0_138 = arith.constant 0 : index
    %72 = vector.load %arg2[%c0_137, %c23, %c0_138] : memref<1x64x256xf32, #tpu.memory_space<vmem>>, vector<1x1x256xf32>
    %c0_139 = arith.constant 0 : index
    %c31 = arith.constant 31 : index
    %c0_140 = arith.constant 0 : index
    %73 = vector.load %arg2[%c0_139, %c31, %c0_140] : memref<1x64x256xf32, #tpu.memory_space<vmem>>, vector<1x1x256xf32>
    %c0_141 = arith.constant 0 : index
    %c39 = arith.constant 39 : index
    %c0_142 = arith.constant 0 : index
    %74 = vector.load %arg2[%c0_141, %c39, %c0_142] : memref<1x64x256xf32, #tpu.memory_space<vmem>>, vector<1x1x256xf32>
    %c0_143 = arith.constant 0 : index
    %c47 = arith.constant 47 : index
    %c0_144 = arith.constant 0 : index
    %75 = vector.load %arg2[%c0_143, %c47, %c0_144] : memref<1x64x256xf32, #tpu.memory_space<vmem>>, vector<1x1x256xf32>
    %c0_145 = arith.constant 0 : index
    %c55 = arith.constant 55 : index
    %c0_146 = arith.constant 0 : index
    %76 = vector.load %arg2[%c0_145, %c55, %c0_146] : memref<1x64x256xf32, #tpu.memory_space<vmem>>, vector<1x1x256xf32>
    %c0_147 = arith.constant 0 : index
    %c63 = arith.constant 63 : index
    %c0_148 = arith.constant 0 : index
    %77 = vector.load %arg2[%c0_147, %c63, %c0_148] : memref<1x64x256xf32, #tpu.memory_space<vmem>>, vector<1x1x256xf32>
    %78 = tpu.concatenate %70, %71, %72, %73, %74, %75, %76, %77 in 1 : vector<1x1x256xf32>, vector<1x1x256xf32>, vector<1x1x256xf32>, vector<1x1x256xf32>, vector<1x1x256xf32>, vector<1x1x256xf32>, vector<1x1x256xf32>, vector<1x1x256xf32> -> vector<1x8x256xf32>
    %c0_149 = arith.constant 0 : index
    %c56_150 = arith.constant 56 : index
    %c0_151 = arith.constant 0 : index
    %79 = vector.load %arg3[%c0_149, %c56_150, %c0_151] : memref<1x64x256xf32, #tpu.memory_space<vmem>>, vector<1x8x256xf32>
    tpu.vector_store %arg3[%c0_149, %c56_150, %c0_151], %78 {strides = array<i32>} : memref<1x64x256xf32, #tpu.memory_space<vmem>>, vector<1x8x256xf32>,
    return
  }
  func.func @transform_0(%arg0: i32, %arg1: i32) -> (i32, i32, i32) {
    %c0_i32 = arith.constant 0 : i32
    %c0_i32_0 = arith.constant 0 : i32
    return %arg0, %c0_i32, %arg1 : i32, i32, i32
  }
  func.func @transform_1(%arg0: i32, %arg1: i32) -> (i32, i32, i32) {
    %c0_i32 = arith.constant 0 : i32
    %c0_i32_0 = arith.constant 0 : i32
    return %arg0, %c0_i32, %arg1 : i32, i32, i32
  }
}

</mosaic_0001>

<llo_original>
// kernel: tpu_custom_call.1
$region0: #{tpu_custom_call.1}
  #allocation0 [shape = 'u32[]', space=smem, size = 0x4, offset = 0x4, fixed_abs, tag = 'smem constant byte address 0x4 - core index']
  #allocation1 [shape = 'u32[144,128]{1,0:T(1,128)}', space=vmem, size = 0x12000, scoped, tag = 'internal scratch']
  %s0 = inlined_call_operand.hbm [shape: f32[2,64,256], index: 0, kind: input, shape index: {}]
  %s1 = inlined_call_operand.hbm [shape: f32[2,64,256], index: 1, kind: output, shape index: {}]
  %s2 = sld [smem:[#allocation0]]
  $region41: #{tpu_custom_call.1} parent=0
    _
  %s4 = ssub.s32 1, %s2
  %s5 = scalar_select 0, %s4, %s2
  $region1: #{tpu_custom_call.1} parent=0
    #allocation2 [shape = 'u8[131072]{0}', space=vmem, size = 0x20000, scoped, tag = 'input window, operand 0']
    #allocation3 [shape = 's32[2]{0}', space=sflag, size = 0x8, scoped, tag = 'scoped memory for tpu_custom_call.1']
    #allocation4 [shape = 's32[2]{0}', space=sflag, size = 0x8, scoped, tag = 'scoped memory for tpu_custom_call.1']
    #allocation5 [shape = 'u8[131072]{0}', space=vmem, size = 0x20000, scoped, tag = 'output window, operand 0']
    %6 = vsyncpa [#allocation3], 0
    %s7 = scalar_lea.sflag [#allocation3], 1
    %8 = vsyncpa %s7, 0
    %9 = vsyncpa [#allocation4], 0
    %s10 = scalar_lea.sflag [#allocation4], 1
    %11 = vsyncpa %s10, 0
    loop: start=0, step=1, limit=4
    $region2: #{tpu_custom_call.1} parent=1 // loop_pre_header
      _
    $region3: #{tpu_custom_call.1} parent=1 // loop_header
      %s13 = sphi 0, %s17
      %p14 = scmp.ge.s32.totalorder %s13, 4
      %s20 = sphi 0, %s32
      %s21 = sphi 0, %s28
      %s22 = sphi 0, %s20
      %s23 = sphi 0, %s21
      %s24 = sphi 0, %s22
      %s25 = sphi 0, %s23
      %s37 = sphi 0, %s39
      %s40 = sphi 0, %s37
      %s41 = sphi 0, %s40
      %s57 = sphi 0, %s41
      %s65 = sphi 0, %s67
      %s68 = sphi 0, %s65
      %s69 = sphi 0, %s68
      %s85 = sphi 0, %s69
    $region4: #{tpu_custom_call.1} parent=1 // loop_header_branch
      %16 = sbr.rel (%p14) target = $region8
    $region5: #{tpu_custom_call.1} parent=1 // loop_body
      %s18 = ssub.s32 %s13, 1
      %s19 = ssub.s32 %s13, 2
      %s26 = sadd.s32 1, %s21
      %p27 = scmp.ge.s32.totalorder %s26, 1
      %s28 = scalar_select %p27, 0, %s26
      %s29 = sadd.s32 1, %s20
      %s30 = scalar_select %p27, %s29, %s20
      %p31 = scmp.ge.s32.totalorder %s30, 2
      %s32 = scalar_select %p31, 0, %s30
      %s33 = ssub.s32 %s20, %s32
      %s34 = ssub.s32 %s21, %s28
      %s35 = sor.u32 %s33, %s34
      %p36 = scmp.eq.s32.totalorder %s35, 0
      %s38 = sadd.s32 %s37, 1
      %s39 = scalar_select %p36, %s37, %s38
      %p42 = pneg %p36
      %p43 = scmp.eq.s32.totalorder %s13, 1
      %p44 = por %p42, %p43
      %p45 = scmp.ne.s32.totalorder %s37, %s40
      %p46 = scmp.eq.s32.totalorder %s13, 0
      %p47 = por %p45, %p46
      %p48 = scmp.ne.s32.totalorder %s37, %s40
      %p49 = scmp.eq.s32.totalorder %s18, 1
      %p50 = por %p48, %p49
      %p51 = scmp.ne.s32.totalorder %s40, %s41
      %p52 = scmp.eq.s32.totalorder %s18, 0
      %p53 = por %p51, %p52
      %p54 = scmp.ne.s32.totalorder %s40, %s41
      %p55 = scmp.eq.s32.totalorder %s19, 1
      %p56 = por %p54, %p55
      %p58 = scmp.ne.s32.totalorder %s41, %s57
      %p59 = scmp.eq.s32.totalorder %s19, 0
      %p60 = por %p58, %p59
      %s61 = ssub.s32 %s20, %s32
      %s62 = ssub.s32 %s21, %s28
      %s63 = sor.u32 %s61, %s62
      %p64 = scmp.eq.s32.totalorder %s63, 0
      %s66 = sadd.s32 %s65, 1
      %s67 = scalar_select %p64, %s65, %s66
      %p70 = pneg %p64
      %p71 = scmp.eq.s32.totalorder %s13, 1
      %p72 = por %p70, %p71
      %p73 = scmp.ne.s32.totalorder %s65, %s68
      %p74 = scmp.eq.s32.totalorder %s13, 0
      %p75 = por %p73, %p74
      %p76 = scmp.ne.s32.totalorder %s65, %s68
      %p77 = scmp.eq.s32.totalorder %s18, 1
      %p78 = por %p76, %p77
      %p79 = scmp.ne.s32.totalorder %s68, %s69
      %p80 = scmp.eq.s32.totalorder %s18, 0
      %p81 = por %p79, %p80
      %p82 = scmp.ne.s32.totalorder %s68, %s69
      %p83 = scmp.eq.s32.totalorder %s19, 1
      %p84 = por %p82, %p83
      %p86 = scmp.ne.s32.totalorder %s69, %s85
      %p87 = scmp.eq.s32.totalorder %s19, 0
      %p88 = por %p86, %p87
      %p89 = scmp.le.s32.totalorder 1, %s13
      %p90 = scmp.lt.s32.totalorder %s13, 3
      %p91 = pnand %p89, %p90
      %p92 = pneg %p91
      // Predicated region
      $region9: #{tpu_custom_call.1} parent=5 // pred_check
        _
      $region10: #{tpu_custom_call.1} parent=5 // pred_check_branch
        %94 = sbr.rel (%p91) target = $region12
      $region11: #{tpu_custom_call.1} parent=5 // pred_region
        %s95 = ssub.s32 %s13, 1
      $region12: #{tpu_custom_call.1} parent=5 // pred_fallthru
        _
      %p96 = scmp.lt.s32.totalorder %s13, 2
      // Predicated region
      $region13: #{tpu_custom_call.1} parent=5 // pred_check
        %p97 = pneg %p96
      $region14: #{tpu_custom_call.1} parent=5 // pred_check_branch
        %99 = sbr.rel (%p97) target = $region16
      $region15: #{tpu_custom_call.1} parent=5 // pred_region
        // Predicated region
        $region17: #{tpu_custom_call.1} parent=15 // pred_check
          %p100 = pneg %p47
        $region18: #{tpu_custom_call.1} parent=15 // pred_check_branch
          %102 = sbr.rel (%p100) target = $region20
        $region19: #{tpu_custom_call.1} parent=15 // pred_region
          %s103 = sand.u32 %s37, 1
          %s104 = scalar_lea.sflag [#allocation3], %s103
          %s105 = sand.u32 %s37, 1
          %s106 = smul.addr %s105, 128
          %s107 = scalar_lea.vmem [#allocation2], %s106
          %s108 = smul.u32 2, %s21
          %s110 = ssub.s32 2048, 2048
          %111 = vsyncadd %s104, %s110
          %s112 = smul.addr %s20, 16
          %s113 = sadd.s32 %s108, %s112
          %s114 = smul.addr %s113, 128
          %s115 = scalar_lea.hbm %s0, %s114
          %s116 = sshll.u32 %s107, 4
          %s117 = int_to_ptr.vmem [resolvable:$true] %s116
          %122 = dma.hbm_to_vmem [thread:$0]  %s115, 2048, %s117, %s104, 256, 256, 16
        $region20: #{tpu_custom_call.1} parent=15 // pred_fallthru
          _
      $region16: #{tpu_custom_call.1} parent=5 // pred_fallthru
        _
      %p123 = scmp.le.s32.totalorder 1, %s13
      %p124 = scmp.lt.s32.totalorder %s13, 3
      %p125 = pnand %p123, %p124
      %p126 = pneg %p125
      // Predicated region
      $region21: #{tpu_custom_call.1} parent=5 // pred_check
        _
      $region22: #{tpu_custom_call.1} parent=5 // pred_check_branch
        %128 = sbr.rel (%p125) target = $region24
      $region23: #{tpu_custom_call.1} parent=5 // pred_region
        %s129 = ssub.s32 %s13, 1
        %s130 = sand.u32 %s40, 1
        %s131 = scalar_lea.sflag [#allocation3], %s130
        %s132 = sand.u32 %s40, 1
        %s133 = smul.addr %s132, 128
        %s134 = scalar_lea.vmem [#allocation2], %s133
        // Predicated region
        $region25: #{tpu_custom_call.1} parent=23 // pred_check
          %p135 = pneg %p53
        $region26: #{tpu_custom_call.1} parent=23 // pred_check_branch
          %137 = sbr.rel (%p135) target = $region28
        $region27: #{tpu_custom_call.1} parent=23 // pred_region
          %138 = dma.done %s131, 2048
        $region28: #{tpu_custom_call.1} parent=23 // pred_fallthru
          _
        %s139 = sand.u32 %s40, 1
        %s140 = scalar_lea.sflag [#allocation3], %s139
        %s141 = sand.u32 %s40, 1
        %s142 = smul.addr %s141, 128
        %s143 = scalar_lea.vmem [#allocation2], %s142
        %p144 = pneg %p53
        %p145 = pneg %p50
        %p146 = pneg %p81
        %p147 = pneg %p78
        %s148 = sand.u32 %s68, 1
        %s149 = scalar_lea.sflag [#allocation4], %s148
        %s150 = sand.u32 %s68, 1
        %s151 = smul.addr %s150, 128
        %s152 = scalar_lea.vmem [#allocation5], %s151
        %s153 = smul.u32 2, %s23
        %s154 = smul.u32 2, %s23
        %v155 = vld [vmem:[%s134] ss:$8 sm:$0x3]
        %s156 = scalar_lea.vmem %s134, 16 [#allocation2]
        %v157 = vld [vmem:[%s156] ss:$8 sm:$0x3]
        %s158 = scalar_lea.vmem %s134, 32 [#allocation2]
        %v159 = vld [vmem:[%s158] ss:$8 sm:$0x3]
        %s160 = scalar_lea.vmem %s134, 48 [#allocation2]
        %v161 = vld [vmem:[%s160] ss:$8 sm:$0x3]
        %s162 = scalar_lea.vmem %s134, 64 [#allocation2]
        %v163 = vld [vmem:[%s162] ss:$8 sm:$0x3]
        %s164 = scalar_lea.vmem %s134, 80 [#allocation2]
        %v165 = vld [vmem:[%s164] ss:$8 sm:$0x3]
        %s166 = scalar_lea.vmem %s134, 96 [#allocation2]
        %v167 = vld [vmem:[%s166] ss:$8 sm:$0x3]
        %s168 = scalar_lea.vmem %s134, 112 [#allocation2]
        %v169 = vld [vmem:[%s168] ss:$8 sm:$0x3]
        %v171 = vlaneseq
        %v172 = vshrl.u32 %v171, 7
        %v173 = vsub.s32 0, %v172
        %v174 = vrot.slane %v155, %v173
        %v175 = vlaneseq
        %v176 = vshrl.u32 %v175, 7
        %v177 = vsub.s32 1, %v176
        %v178 = vrot.slane %v155, %v177
        %v182 = vlaneseq
        %v183 = vshrl.u32 %v182, 7
        %v184 = vsub.s32 0, %v183
        %v185 = vrot.slane %v157, %v184
        %v186 = vlaneseq
        %v187 = vshrl.u32 %v186, 7
        %v188 = vsub.s32 1, %v187
        %v189 = vrot.slane %v157, %v188
        %v193 = vlaneseq
        %v194 = vshrl.u32 %v193, 7
        %v195 = vsub.s32 0, %v194
        %v196 = vrot.slane %v159, %v195
        %v197 = vlaneseq
        %v198 = vshrl.u32 %v197, 7
        %v199 = vsub.s32 1, %v198
        %v200 = vrot.slane %v159, %v199
        %v204 = vlaneseq
        %v205 = vshrl.u32 %v204, 7
        %v206 = vsub.s32 0, %v205
        %v207 = vrot.slane %v161, %v206
        %v208 = vlaneseq
        %v209 = vshrl.u32 %v208, 7
        %v210 = vsub.s32 1, %v209
        %v211 = vrot.slane %v161, %v210
        %v215 = vlaneseq
        %v216 = vshrl.u32 %v215, 7
        %v217 = vsub.s32 0, %v216
        %v218 = vrot.slane %v163, %v217
        %v219 = vlaneseq
        %v220 = vshrl.u32 %v219, 7
        %v221 = vsub.s32 1, %v220
        %v222 = vrot.slane %v163, %v221
        %v226 = vlaneseq
        %v227 = vshrl.u32 %v226, 7
        %v228 = vsub.s32 0, %v227
        %v229 = vrot.slane %v165, %v228
        %v230 = vlaneseq
        %v231 = vshrl.u32 %v230, 7
        %v232 = vsub.s32 1, %v231
        %v233 = vrot.slane %v165, %v232
        %v237 = vlaneseq
        %v238 = vshrl.u32 %v237, 7
        %v239 = vsub.s32 0, %v238
        %v240 = vrot.slane %v167, %v239
        %v241 = vlaneseq
        %v242 = vshrl.u32 %v241, 7
        %v243 = vsub.s32 1, %v242
        %v244 = vrot.slane %v167, %v243
        %v248 = vlaneseq
        %v249 = vshrl.u32 %v248, 7
        %v250 = vsub.s32 0, %v249
        %v251 = vrot.slane %v169, %v250
        %v252 = vlaneseq
        %v253 = vshrl.u32 %v252, 7
        %v254 = vsub.s32 1, %v253
        %v255 = vrot.slane %v169, %v254
        %vm258 = vcmask 1040384
        %v259 = vsel %vm258, %v174, %v185
        %v260 = vsel %vm258, %v178, %v189
        %vm261 = vcmask 1041408
        %v262 = vsel %vm261, %v259, %v196
        %v263 = vsel %vm261, %v260, %v200
        %vm264 = vcmask 1042432
        %v265 = vsel %vm264, %v262, %v207
        %v266 = vsel %vm264, %v263, %v211
        %vm267 = vcmask 1043456
        %v268 = vsel %vm267, %v265, %v218
        %v269 = vsel %vm267, %v266, %v222
        %vm270 = vcmask 1044480
        %v271 = vsel %vm270, %v268, %v229
        %v272 = vsel %vm270, %v269, %v233
        %vm273 = vcmask 1045504
        %v274 = vsel %vm273, %v271, %v240
        %v275 = vsel %vm273, %v272, %v244
        %vm276 = vcmask 1046528
        %v277 = vsel %vm276, %v274, %v251
        %v278 = vsel %vm276, %v275, %v255
        %279 = vst [vmem:[%s152] sm:$0xff] %v277
        %280 = vst [vmem:[%s152 + $0x8] sm:$0xff] %v278
        %s281 = scalar_lea.vmem %s134, 1 [#allocation2]
        %v282 = vld [vmem:[%s281] ss:$8 sm:$0x3]
        %s283 = scalar_lea.vmem %s134, 17 [#allocation2]
        %v284 = vld [vmem:[%s283] ss:$8 sm:$0x3]
        %s285 = scalar_lea.vmem %s134, 33 [#allocation2]
        %v286 = vld [vmem:[%s285] ss:$8 sm:$0x3]
        %s287 = scalar_lea.vmem %s134, 49 [#allocation2]
        %v288 = vld [vmem:[%s287] ss:$8 sm:$0x3]
        %s289 = scalar_lea.vmem %s134, 65 [#allocation2]
        %v290 = vld [vmem:[%s289] ss:$8 sm:$0x3]
        %s291 = scalar_lea.vmem %s134, 81 [#allocation2]
        %v292 = vld [vmem:[%s291] ss:$8 sm:$0x3]
        %s293 = scalar_lea.vmem %s134, 97 [#allocation2]
        %v294 = vld [vmem:[%s293] ss:$8 sm:$0x3]
        %s295 = scalar_lea.vmem %s134, 113 [#allocation2]
        %v296 = vld [vmem:[%s295] ss:$8 sm:$0x3]
        %v298 = vlaneseq
        %v299 = vshrl.u32 %v298, 7
        %v300 = vsub.s32 0, %v299
        %v301 = vrot.slane %v282, %v300
        %v302 = vlaneseq
        %v303 = vshrl.u32 %v302, 7
        %v304 = vsub.s32 1, %v303
        %v305 = vrot.slane %v282, %v304
        %v309 = vlaneseq
        %v310 = vshrl.u32 %v309, 7
        %v311 = vsub.s32 0, %v310
        %v312 = vrot.slane %v284, %v311
        %v313 = vlaneseq
        %v314 = vshrl.u32 %v313, 7
        %v315 = vsub.s32 1, %v314
        %v316 = vrot.slane %v284, %v315
        %v320 = vlaneseq
        %v321 = vshrl.u32 %v320, 7
        %v322 = vsub.s32 0, %v321
        %v323 = vrot.slane %v286, %v322
        %v324 = vlaneseq
        %v325 = vshrl.u32 %v324, 7
        %v326 = vsub.s32 1, %v325
        %v327 = vrot.slane %v286, %v326
        %v331 = vlaneseq
        %v332 = vshrl.u32 %v331, 7
        %v333 = vsub.s32 0, %v332
        %v334 = vrot.slane %v288, %v333
        %v335 = vlaneseq
        %v336 = vshrl.u32 %v335, 7
        %v337 = vsub.s32 1, %v336
        %v338 = vrot.slane %v288, %v337
        %v342 = vlaneseq
        %v343 = vshrl.u32 %v342, 7
        %v344 = vsub.s32 0, %v343
        %v345 = vrot.slane %v290, %v344
        %v346 = vlaneseq
        %v347 = vshrl.u32 %v346, 7
        %v348 = vsub.s32 1, %v347
        %v349 = vrot.slane %v290, %v348
        %v353 = vlaneseq
        %v354 = vshrl.u32 %v353, 7
        %v355 = vsub.s32 0, %v354
        %v356 = vrot.slane %v292, %v355
        %v357 = vlaneseq
        %v358 = vshrl.u32 %v357, 7
        %v359 = vsub.s32 1, %v358
        %v360 = vrot.slane %v292, %v359
        %v364 = vlaneseq
        %v365 = vshrl.u32 %v364, 7
        %v366 = vsub.s32 0, %v365
        %v367 = vrot.slane %v294, %v366
        %v368 = vlaneseq
        %v369 = vshrl.u32 %v368, 7
        %v370 = vsub.s32 1, %v369
        %v371 = vrot.slane %v294, %v370
        %v375 = vlaneseq
        %v376 = vshrl.u32 %v375, 7
        %v377 = vsub.s32 0, %v376
        %v378 = vrot.slane %v296, %v377
        %v379 = vlaneseq
        %v380 = vshrl.u32 %v379, 7
        %v381 = vsub.s32 1, %v380
        %v382 = vrot.slane %v296, %v381
        %v385 = vsel %vm258, %v301, %v312
        %v386 = vsel %vm258, %v305, %v316
        %v387 = vsel %vm261, %v385, %v323
        %v388 = vsel %vm261, %v386, %v327
        %v389 = vsel %vm264, %v387, %v334
        %v390 = vsel %vm264, %v388, %v338
        %v391 = vsel %vm267, %v389, %v345
        %v392 = vsel %vm267, %v390, %v349
        %v393 = vsel %vm270, %v391, %v356
        %v394 = vsel %vm270, %v392, %v360
        %v395 = vsel %vm273, %v393, %v367
        %v396 = vsel %vm273, %v394, %v371
        %v397 = vsel %vm276, %v395, %v378
        %v398 = vsel %vm276, %v396, %v382
        %399 = vst [vmem:[%s152 + $0x10] sm:$0xff] %v397
        %400 = vst [vmem:[%s152 + $0x18] sm:$0xff] %v398
        %s401 = scalar_lea.vmem %s134, 2 [#allocation2]
        %v402 = vld [vmem:[%s401] ss:$8 sm:$0x3]
        %s403 = scalar_lea.vmem %s134, 18 [#allocation2]
        %v404 = vld [vmem:[%s403] ss:$8 sm:$0x3]
        %s405 = scalar_lea.vmem %s134, 34 [#allocation2]
        %v406 = vld [vmem:[%s405] ss:$8 sm:$0x3]
        %s407 = scalar_lea.vmem %s134, 50 [#allocation2]
        %v408 = vld [vmem:[%s407] ss:$8 sm:$0x3]
        %s409 = scalar_lea.vmem %s134, 66 [#allocation2]
        %v410 = vld [vmem:[%s409] ss:$8 sm:$0x3]
        %s411 = scalar_lea.vmem %s134, 82 [#allocation2]
        %v412 = vld [vmem:[%s411] ss:$8 sm:$0x3]
        %s413 = scalar_lea.vmem %s134, 98 [#allocation2]
        %v414 = vld [vmem:[%s413] ss:$8 sm:$0x3]
        %s415 = scalar_lea.vmem %s134, 114 [#allocation2]
        %v416 = vld [vmem:[%s415] ss:$8 sm:$0x3]
        %v418 = vlaneseq
        %v419 = vshrl.u32 %v418, 7
        %v420 = vsub.s32 0, %v419
        %v421 = vrot.slane %v402, %v420
        %v422 = vlaneseq
        %v423 = vshrl.u32 %v422, 7
        %v424 = vsub.s32 1, %v423
        %v425 = vrot.slane %v402, %v424
        %v429 = vlaneseq
        %v430 = vshrl.u32 %v429, 7
        %v431 = vsub.s32 0, %v430
        %v432 = vrot.slane %v404, %v431
        %v433 = vlaneseq
        %v434 = vshrl.u32 %v433, 7
        %v435 = vsub.s32 1, %v434
        %v436 = vrot.slane %v404, %v435
        %v440 = vlaneseq
        %v441 = vshrl.u32 %v440, 7
        %v442 = vsub.s32 0, %v441
        %v443 = vrot.slane %v406, %v442
        %v444 = vlaneseq
        %v445 = vshrl.u32 %v444, 7
        %v446 = vsub.s32 1, %v445
        %v447 = vrot.slane %v406, %v446
        %v451 = vlaneseq
        %v452 = vshrl.u32 %v451, 7
        %v453 = vsub.s32 0, %v452
        %v454 = vrot.slane %v408, %v453
        %v455 = vlaneseq
        %v456 = vshrl.u32 %v455, 7
        %v457 = vsub.s32 1, %v456
        %v458 = vrot.slane %v408, %v457
        %v462 = vlaneseq
        %v463 = vshrl.u32 %v462, 7
        %v464 = vsub.s32 0, %v463
        %v465 = vrot.slane %v410, %v464
        %v466 = vlaneseq
        %v467 = vshrl.u32 %v466, 7
        %v468 = vsub.s32 1, %v467
        %v469 = vrot.slane %v410, %v468
        %v473 = vlaneseq
        %v474 = vshrl.u32 %v473, 7
        %v475 = vsub.s32 0, %v474
        %v476 = vrot.slane %v412, %v475
        %v477 = vlaneseq
        %v478 = vshrl.u32 %v477, 7
        %v479 = vsub.s32 1, %v478
        %v480 = vrot.slane %v412, %v479
        %v484 = vlaneseq
        %v485 = vshrl.u32 %v484, 7
        %v486 = vsub.s32 0, %v485
        %v487 = vrot.slane %v414, %v486
        %v488 = vlaneseq
        %v489 = vshrl.u32 %v488, 7
        %v490 = vsub.s32 1, %v489
        %v491 = vrot.slane %v414, %v490
        %v495 = vlaneseq
        %v496 = vshrl.u32 %v495, 7
        %v497 = vsub.s32 0, %v496
        %v498 = vrot.slane %v416, %v497
        %v499 = vlaneseq
        %v500 = vshrl.u32 %v499, 7
        %v501 = vsub.s32 1, %v500
        %v502 = vrot.slane %v416, %v501
        %v505 = vsel %vm258, %v421, %v432
        %v506 = vsel %vm258, %v425, %v436
        %v507 = vsel %vm261, %v505, %v443
        %v508 = vsel %vm261, %v506, %v447
        %v509 = vsel %vm264, %v507, %v454
        %v510 = vsel %vm264, %v508, %v458
        %v511 = vsel %vm267, %v509, %v465
        %v512 = vsel %vm267, %v510, %v469
        %v513 = vsel %vm270, %v511, %v476
        %v514 = vsel %vm270, %v512, %v480
        %v515 = vsel %vm273, %v513, %v487
        %v516 = vsel %vm273, %v514, %v491
        %v517 = vsel %vm276, %v515, %v498
        %v518 = vsel %vm276, %v516, %v502
        %519 = vst [vmem:[%s152 + $0x20] sm:$0xff] %v517
        %520 = vst [vmem:[%s152 + $0x28] sm:$0xff] %v518
        %s521 = scalar_lea.vmem %s134, 3 [#allocation2]
        %v522 = vld [vmem:[%s521] ss:$8 sm:$0x3]
        %s523 = scalar_lea.vmem %s134, 19 [#allocation2]
        %v524 = vld [vmem:[%s523] ss:$8 sm:$0x3]
        %s525 = scalar_lea.vmem %s134, 35 [#allocation2]
        %v526 = vld [vmem:[%s525] ss:$8 sm:$0x3]
        %s527 = scalar_lea.vmem %s134, 51 [#allocation2]
        %v528 = vld [vmem:[%s527] ss:$8 sm:$0x3]
        %s529 = scalar_lea.vmem %s134, 67 [#allocation2]
        %v530 = vld [vmem:[%s529] ss:$8 sm:$0x3]
        %s531 = scalar_lea.vmem %s134, 83 [#allocation2]
        %v532 = vld [vmem:[%s531] ss:$8 sm:$0x3]
        %s533 = scalar_lea.vmem %s134, 99 [#allocation2]
        %v534 = vld [vmem:[%s533] ss:$8 sm:$0x3]
        %s535 = scalar_lea.vmem %s134, 115 [#allocation2]
        %v536 = vld [vmem:[%s535] ss:$8 sm:$0x3]
        %v538 = vlaneseq
        %v539 = vshrl.u32 %v538, 7
        %v540 = vsub.s32 0, %v539
        %v541 = vrot.slane %v522, %v540
        %v542 = vlaneseq
        %v543 = vshrl.u32 %v542, 7
        %v544 = vsub.s32 1, %v543
        %v545 = vrot.slane %v522, %v544
        %v549 = vlaneseq
        %v550 = vshrl.u32 %v549, 7
        %v551 = vsub.s32 0, %v550
        %v552 = vrot.slane %v524, %v551
        %v553 = vlaneseq
        %v554 = vshrl.u32 %v553, 7
        %v555 = vsub.s32 1, %v554
        %v556 = vrot.slane %v524, %v555
        %v560 = vlaneseq
        %v561 = vshrl.u32 %v560, 7
        %v562 = vsub.s32 0, %v561
        %v563 = vrot.slane %v526, %v562
        %v564 = vlaneseq
        %v565 = vshrl.u32 %v564, 7
        %v566 = vsub.s32 1, %v565
        %v567 = vrot.slane %v526, %v566
        %v571 = vlaneseq
        %v572 = vshrl.u32 %v571, 7
        %v573 = vsub.s32 0, %v572
        %v574 = vrot.slane %v528, %v573
        %v575 = vlaneseq
        %v576 = vshrl.u32 %v575, 7
        %v577 = vsub.s32 1, %v576
        %v578 = vrot.slane %v528, %v577
        %v582 = vlaneseq
        %v583 = vshrl.u32 %v582, 7
        %v584 = vsub.s32 0, %v583
        %v585 = vrot.slane %v530, %v584
        %v586 = vlaneseq
        %v587 = vshrl.u32 %v586, 7
        %v588 = vsub.s32 1, %v587
        %v589 = vrot.slane %v530, %v588
        %v593 = vlaneseq
        %v594 = vshrl.u32 %v593, 7
        %v595 = vsub.s32 0, %v594
        %v596 = vrot.slane %v532, %v595
        %v597 = vlaneseq
        %v598 = vshrl.u32 %v597, 7
        %v599 = vsub.s32 1, %v598
        %v600 = vrot.slane %v532, %v599
        %v604 = vlaneseq
        %v605 = vshrl.u32 %v604, 7
        %v606 = vsub.s32 0, %v605
        %v607 = vrot.slane %v534, %v606
        %v608 = vlaneseq
        %v609 = vshrl.u32 %v608, 7
        %v610 = vsub.s32 1, %v609
        %v611 = vrot.slane %v534, %v610
        %v615 = vlaneseq
        %v616 = vshrl.u32 %v615, 7
        %v617 = vsub.s32 0, %v616
        %v618 = vrot.slane %v536, %v617
        %v619 = vlaneseq
        %v620 = vshrl.u32 %v619, 7
        %v621 = vsub.s32 1, %v620
        %v622 = vrot.slane %v536, %v621
        %v625 = vsel %vm258, %v541, %v552
        %v626 = vsel %vm258, %v545, %v556
        %v627 = vsel %vm261, %v625, %v563
        %v628 = vsel %vm261, %v626, %v567
        %v629 = vsel %vm264, %v627, %v574
        %v630 = vsel %vm264, %v628, %v578
        %v631 = vsel %vm267, %v629, %v585
        %v632 = vsel %vm267, %v630, %v589
        %v633 = vsel %vm270, %v631, %v596
        %v634 = vsel %vm270, %v632, %v600
        %v635 = vsel %vm273, %v633, %v607
        %v636 = vsel %vm273, %v634, %v611
        %v637 = vsel %vm276, %v635, %v618
        %v638 = vsel %vm276, %v636, %v622
        %639 = vst [vmem:[%s152 + $0x30] sm:$0xff] %v637
        %640 = vst [vmem:[%s152 + $0x38] sm:$0xff] %v638
        %s641 = scalar_lea.vmem %s134, 4 [#allocation2]
        %v642 = vld [vmem:[%s641] ss:$8 sm:$0x3]
        %s643 = scalar_lea.vmem %s134, 20 [#allocation2]
        %v644 = vld [vmem:[%s643] ss:$8 sm:$0x3]
        %s645 = scalar_lea.vmem %s134, 36 [#allocation2]
        %v646 = vld [vmem:[%s645] ss:$8 sm:$0x3]
        %s647 = scalar_lea.vmem %s134, 52 [#allocation2]
        %v648 = vld [vmem:[%s647] ss:$8 sm:$0x3]
        %s649 = scalar_lea.vmem %s134, 68 [#allocation2]
        %v650 = vld [vmem:[%s649] ss:$8 sm:$0x3]
        %s651 = scalar_lea.vmem %s134, 84 [#allocation2]
        %v652 = vld [vmem:[%s651] ss:$8 sm:$0x3]
        %s653 = scalar_lea.vmem %s134, 100 [#allocation2]
        %v654 = vld [vmem:[%s653] ss:$8 sm:$0x3]
        %s655 = scalar_lea.vmem %s134, 116 [#allocation2]
        %v656 = vld [vmem:[%s655] ss:$8 sm:$0x3]
        %v658 = vlaneseq
        %v659 = vshrl.u32 %v658, 7
        %v660 = vsub.s32 0, %v659
        %v661 = vrot.slane %v642, %v660
        %v662 = vlaneseq
        %v663 = vshrl.u32 %v662, 7
        %v664 = vsub.s32 1, %v663
        %v665 = vrot.slane %v642, %v664
        %v669 = vlaneseq
        %v670 = vshrl.u32 %v669, 7
        %v671 = vsub.s32 0, %v670
        %v672 = vrot.slane %v644, %v671
        %v673 = vlaneseq
        %v674 = vshrl.u32 %v673, 7
        %v675 = vsub.s32 1, %v674
        %v676 = vrot.slane %v644, %v675
        %v680 = vlaneseq
        %v681 = vshrl.u32 %v680, 7
        %v682 = vsub.s32 0, %v681
        %v683 = vrot.slane %v646, %v682
        %v684 = vlaneseq
        %v685 = vshrl.u32 %v684, 7
        %v686 = vsub.s32 1, %v685
        %v687 = vrot.slane %v646, %v686
        %v691 = vlaneseq
        %v692 = vshrl.u32 %v691, 7
        %v693 = vsub.s32 0, %v692
        %v694 = vrot.slane %v648, %v693
        %v695 = vlaneseq
        %v696 = vshrl.u32 %v695, 7
        %v697 = vsub.s32 1, %v696
        %v698 = vrot.slane %v648, %v697
        %v702 = vlaneseq
        %v703 = vshrl.u32 %v702, 7
        %v704 = vsub.s32 0, %v703
        %v705 = vrot.slane %v650, %v704
        %v706 = vlaneseq
        %v707 = vshrl.u32 %v706, 7
        %v708 = vsub.s32 1, %v707
        %v709 = vrot.slane %v650, %v708
        %v713 = vlaneseq
        %v714 = vshrl.u32 %v713, 7
        %v715 = vsub.s32 0, %v714
        %v716 = vrot.slane %v652, %v715
        %v717 = vlaneseq
        %v718 = vshrl.u32 %v717, 7
        %v719 = vsub.s32 1, %v718
        %v720 = vrot.slane %v652, %v719
        %v724 = vlaneseq
        %v725 = vshrl.u32 %v724, 7
        %v726 = vsub.s32 0, %v725
        %v727 = vrot.slane %v654, %v726
        %v728 = vlaneseq
        %v729 = vshrl.u32 %v728, 7
        %v730 = vsub.s32 1, %v729
        %v731 = vrot.slane %v654, %v730
        %v735 = vlaneseq
        %v736 = vshrl.u32 %v735, 7
        %v737 = vsub.s32 0, %v736
        %v738 = vrot.slane %v656, %v737
        %v739 = vlaneseq
        %v740 = vshrl.u32 %v739, 7
        %v741 = vsub.s32 1, %v740
        %v742 = vrot.slane %v656, %v741
        %v745 = vsel %vm258, %v661, %v672
        %v746 = vsel %vm258, %v665, %v676
        %v747 = vsel %vm261, %v745, %v683
        %v748 = vsel %vm261, %v746, %v687
        %v749 = vsel %vm264, %v747, %v694
        %v750 = vsel %vm264, %v748, %v698
        %v751 = vsel %vm267, %v749, %v705
        %v752 = vsel %vm267, %v750, %v709
        %v753 = vsel %vm270, %v751, %v716
        %v754 = vsel %vm270, %v752, %v720
        %v755 = vsel %vm273, %v753, %v727
        %v756 = vsel %vm273, %v754, %v731
        %v757 = vsel %vm276, %v755, %v738
        %v758 = vsel %vm276, %v756, %v742
        %759 = vst [vmem:[%s152 + $0x40] sm:$0xff] %v757
        %760 = vst [vmem:[%s152 + $0x48] sm:$0xff] %v758
        %s761 = scalar_lea.vmem %s134, 5 [#allocation2]
        %v762 = vld [vmem:[%s761] ss:$8 sm:$0x3]
        %s763 = scalar_lea.vmem %s134, 21 [#allocation2]
        %v764 = vld [vmem:[%s763] ss:$8 sm:$0x3]
        %s765 = scalar_lea.vmem %s134, 37 [#allocation2]
        %v766 = vld [vmem:[%s765] ss:$8 sm:$0x3]
        %s767 = scalar_lea.vmem %s134, 53 [#allocation2]
        %v768 = vld [vmem:[%s767] ss:$8 sm:$0x3]
        %s769 = scalar_lea.vmem %s134, 69 [#allocation2]
        %v770 = vld [vmem:[%s769] ss:$8 sm:$0x3]
        %s771 = scalar_lea.vmem %s134, 85 [#allocation2]
        %v772 = vld [vmem:[%s771] ss:$8 sm:$0x3]
        %s773 = scalar_lea.vmem %s134, 101 [#allocation2]
        %v774 = vld [vmem:[%s773] ss:$8 sm:$0x3]
        %s775 = scalar_lea.vmem %s134, 117 [#allocation2]
        %v776 = vld [vmem:[%s775] ss:$8 sm:$0x3]
        %v778 = vlaneseq
        %v779 = vshrl.u32 %v778, 7
        %v780 = vsub.s32 0, %v779
        %v781 = vrot.slane %v762, %v780
        %v782 = vlaneseq
        %v783 = vshrl.u32 %v782, 7
        %v784 = vsub.s32 1, %v783
        %v785 = vrot.slane %v762, %v784
        %v789 = vlaneseq
        %v790 = vshrl.u32 %v789, 7
        %v791 = vsub.s32 0, %v790
        %v792 = vrot.slane %v764, %v791
        %v793 = vlaneseq
        %v794 = vshrl.u32 %v793, 7
        %v795 = vsub.s32 1, %v794
        %v796 = vrot.slane %v764, %v795
        %v800 = vlaneseq
        %v801 = vshrl.u32 %v800, 7
        %v802 = vsub.s32 0, %v801
        %v803 = vrot.slane %v766, %v802
        %v804 = vlaneseq
        %v805 = vshrl.u32 %v804, 7
        %v806 = vsub.s32 1, %v805
        %v807 = vrot.slane %v766, %v806
        %v811 = vlaneseq
        %v812 = vshrl.u32 %v811, 7
        %v813 = vsub.s32 0, %v812
        %v814 = vrot.slane %v768, %v813
        %v815 = vlaneseq
        %v816 = vshrl.u32 %v815, 7
        %v817 = vsub.s32 1, %v816
        %v818 = vrot.slane %v768, %v817
        %v822 = vlaneseq
        %v823 = vshrl.u32 %v822, 7
        %v824 = vsub.s32 0, %v823
        %v825 = vrot.slane %v770, %v824
        %v826 = vlaneseq
        %v827 = vshrl.u32 %v826, 7
        %v828 = vsub.s32 1, %v827
        %v829 = vrot.slane %v770, %v828
        %v833 = vlaneseq
        %v834 = vshrl.u32 %v833, 7
        %v835 = vsub.s32 0, %v834
        %v836 = vrot.slane %v772, %v835
        %v837 = vlaneseq
        %v838 = vshrl.u32 %v837, 7
        %v839 = vsub.s32 1, %v838
        %v840 = vrot.slane %v772, %v839
        %v844 = vlaneseq
        %v845 = vshrl.u32 %v844, 7
        %v846 = vsub.s32 0, %v845
        %v847 = vrot.slane %v774, %v846
        %v848 = vlaneseq
        %v849 = vshrl.u32 %v848, 7
        %v850 = vsub.s32 1, %v849
        %v851 = vrot.slane %v774, %v850
        %v855 = vlaneseq
        %v856 = vshrl.u32 %v855, 7
        %v857 = vsub.s32 0, %v856
        %v858 = vrot.slane %v776, %v857
        %v859 = vlaneseq
        %v860 = vshrl.u32 %v859, 7
        %v861 = vsub.s32 1, %v860
        %v862 = vrot.slane %v776, %v861
        %v865 = vsel %vm258, %v781, %v792
        %v866 = vsel %vm258, %v785, %v796
        %v867 = vsel %vm261, %v865, %v803
        %v868 = vsel %vm261, %v866, %v807
        %v869 = vsel %vm264, %v867, %v814
        %v870 = vsel %vm264, %v868, %v818
        %v871 = vsel %vm267, %v869, %v825
        %v872 = vsel %vm267, %v870, %v829
        %v873 = vsel %vm270, %v871, %v836
        %v874 = vsel %vm270, %v872, %v840
        %v875 = vsel %vm273, %v873, %v847
        %v876 = vsel %vm273, %v874, %v851
        %v877 = vsel %vm276, %v875, %v858
        %v878 = vsel %vm276, %v876, %v862
        %879 = vst [vmem:[%s152 + $0x50] sm:$0xff] %v877
        %880 = vst [vmem:[%s152 + $0x58] sm:$0xff] %v878
        %s881 = scalar_lea.vmem %s134, 6 [#allocation2]
        %v882 = vld [vmem:[%s881] ss:$8 sm:$0x3]
        %s883 = scalar_lea.vmem %s134, 22 [#allocation2]
        %v884 = vld [vmem:[%s883] ss:$8 sm:$0x3]
        %s885 = scalar_lea.vmem %s134, 38 [#allocation2]
        %v886 = vld [vmem:[%s885] ss:$8 sm:$0x3]
        %s887 = scalar_lea.vmem %s134, 54 [#allocation2]
        %v888 = vld [vmem:[%s887] ss:$8 sm:$0x3]
        %s889 = scalar_lea.vmem %s134, 70 [#allocation2]
        %v890 = vld [vmem:[%s889] ss:$8 sm:$0x3]
        %s891 = scalar_lea.vmem %s134, 86 [#allocation2]
        %v892 = vld [vmem:[%s891] ss:$8 sm:$0x3]
        %s893 = scalar_lea.vmem %s134, 102 [#allocation2]
        %v894 = vld [vmem:[%s893] ss:$8 sm:$0x3]
        %s895 = scalar_lea.vmem %s134, 118 [#allocation2]
        %v896 = vld [vmem:[%s895] ss:$8 sm:$0x3]
        %v898 = vlaneseq
        %v899 = vshrl.u32 %v898, 7
        %v900 = vsub.s32 0, %v899
        %v901 = vrot.slane %v882, %v900
        %v902 = vlaneseq
        %v903 = vshrl.u32 %v902, 7
        %v904 = vsub.s32 1, %v903
        %v905 = vrot.slane %v882, %v904
        %v909 = vlaneseq
        %v910 = vshrl.u32 %v909, 7
        %v911 = vsub.s32 0, %v910
        %v912 = vrot.slane %v884, %v911
        %v913 = vlaneseq
        %v914 = vshrl.u32 %v913, 7
        %v915 = vsub.s32 1, %v914
        %v916 = vrot.slane %v884, %v915
        %v920 = vlaneseq
        %v921 = vshrl.u32 %v920, 7
        %v922 = vsub.s32 0, %v921
        %v923 = vrot.slane %v886, %v922
        %v924 = vlaneseq
        %v925 = vshrl.u32 %v924, 7
        %v926 = vsub.s32 1, %v925
        %v927 = vrot.slane %v886, %v926
        %v931 = vlaneseq
        %v932 = vshrl.u32 %v931, 7
        %v933 = vsub.s32 0, %v932
        %v934 = vrot.slane %v888, %v933
        %v935 = vlaneseq
        %v936 = vshrl.u32 %v935, 7
        %v937 = vsub.s32 1, %v936
        %v938 = vrot.slane %v888, %v937
        %v942 = vlaneseq
        %v943 = vshrl.u32 %v942, 7
        %v944 = vsub.s32 0, %v943
        %v945 = vrot.slane %v890, %v944
        %v946 = vlaneseq
        %v947 = vshrl.u32 %v946, 7
        %v948 = vsub.s32 1, %v947
        %v949 = vrot.slane %v890, %v948
        %v953 = vlaneseq
        %v954 = vshrl.u32 %v953, 7
        %v955 = vsub.s32 0, %v954
        %v956 = vrot.slane %v892, %v955
        %v957 = vlaneseq
        %v958 = vshrl.u32 %v957, 7
        %v959 = vsub.s32 1, %v958
        %v960 = vrot.slane %v892, %v959
        %v964 = vlaneseq
        %v965 = vshrl.u32 %v964, 7
        %v966 = vsub.s32 0, %v965
        %v967 = vrot.slane %v894, %v966
        %v968 = vlaneseq
        %v969 = vshrl.u32 %v968, 7
        %v970 = vsub.s32 1, %v969
        %v971 = vrot.slane %v894, %v970
        %v975 = vlaneseq
        %v976 = vshrl.u32 %v975, 7
        %v977 = vsub.s32 0, %v976
        %v978 = vrot.slane %v896, %v977
        %v979 = vlaneseq
        %v980 = vshrl.u32 %v979, 7
        %v981 = vsub.s32 1, %v980
        %v982 = vrot.slane %v896, %v981
        %v985 = vsel %vm258, %v901, %v912
        %v986 = vsel %vm258, %v905, %v916
        %v987 = vsel %vm261, %v985, %v923
        %v988 = vsel %vm261, %v986, %v927
        %v989 = vsel %vm264, %v987, %v934
        %v990 = vsel %vm264, %v988, %v938
        %v991 = vsel %vm267, %v989, %v945
        %v992 = vsel %vm267, %v990, %v949
        %v993 = vsel %vm270, %v991, %v956
        %v994 = vsel %vm270, %v992, %v960
        %v995 = vsel %vm273, %v993, %v967
        %v996 = vsel %vm273, %v994, %v971
        %v997 = vsel %vm276, %v995, %v978
        %v998 = vsel %vm276, %v996, %v982
        %999 = vst [vmem:[%s152 + $0x60] sm:$0xff] %v997
        %1000 = vst [vmem:[%s152 + $0x68] sm:$0xff] %v998
        %s1001 = scalar_lea.vmem %s134, 7 [#allocation2]
        %v1002 = vld [vmem:[%s1001] ss:$8 sm:$0x3]
        %s1003 = scalar_lea.vmem %s134, 23 [#allocation2]
        %v1004 = vld [vmem:[%s1003] ss:$8 sm:$0x3]
        %s1005 = scalar_lea.vmem %s134, 39 [#allocation2]
        %v1006 = vld [vmem:[%s1005] ss:$8 sm:$0x3]
        %s1007 = scalar_lea.vmem %s134, 55 [#allocation2]
        %v1008 = vld [vmem:[%s1007] ss:$8 sm:$0x3]
        %s1009 = scalar_lea.vmem %s134, 71 [#allocation2]
        %v1010 = vld [vmem:[%s1009] ss:$8 sm:$0x3]
        %s1011 = scalar_lea.vmem %s134, 87 [#allocation2]
        %v1012 = vld [vmem:[%s1011] ss:$8 sm:$0x3]
        %s1013 = scalar_lea.vmem %s134, 103 [#allocation2]
        %v1014 = vld [vmem:[%s1013] ss:$8 sm:$0x3]
        %s1015 = scalar_lea.vmem %s134, 119 [#allocation2]
        %v1016 = vld [vmem:[%s1015] ss:$8 sm:$0x3]
        %v1018 = vlaneseq
        %v1019 = vshrl.u32 %v1018, 7
        %v1020 = vsub.s32 0, %v1019
        %v1021 = vrot.slane %v1002, %v1020
        %v1022 = vlaneseq
        %v1023 = vshrl.u32 %v1022, 7
        %v1024 = vsub.s32 1, %v1023
        %v1025 = vrot.slane %v1002, %v1024
        %v1029 = vlaneseq
        %v1030 = vshrl.u32 %v1029, 7
        %v1031 = vsub.s32 0, %v1030
        %v1032 = vrot.slane %v1004, %v1031
        %v1033 = vlaneseq
        %v1034 = vshrl.u32 %v1033, 7
        %v1035 = vsub.s32 1, %v1034
        %v1036 = vrot.slane %v1004, %v1035
        %v1040 = vlaneseq
        %v1041 = vshrl.u32 %v1040, 7
        %v1042 = vsub.s32 0, %v1041
        %v1043 = vrot.slane %v1006, %v1042
        %v1044 = vlaneseq
        %v1045 = vshrl.u32 %v1044, 7
        %v1046 = vsub.s32 1, %v1045
        %v1047 = vrot.slane %v1006, %v1046
        %v1051 = vlaneseq
        %v1052 = vshrl.u32 %v1051, 7
        %v1053 = vsub.s32 0, %v1052
        %v1054 = vrot.slane %v1008, %v1053
        %v1055 = vlaneseq
        %v1056 = vshrl.u32 %v1055, 7
        %v1057 = vsub.s32 1, %v1056
        %v1058 = vrot.slane %v1008, %v1057
        %v1062 = vlaneseq
        %v1063 = vshrl.u32 %v1062, 7
        %v1064 = vsub.s32 0, %v1063
        %v1065 = vrot.slane %v1010, %v1064
        %v1066 = vlaneseq
        %v1067 = vshrl.u32 %v1066, 7
        %v1068 = vsub.s32 1, %v1067
        %v1069 = vrot.slane %v1010, %v1068
        %v1073 = vlaneseq
        %v1074 = vshrl.u32 %v1073, 7
        %v1075 = vsub.s32 0, %v1074
        %v1076 = vrot.slane %v1012, %v1075
        %v1077 = vlaneseq
        %v1078 = vshrl.u32 %v1077, 7
        %v1079 = vsub.s32 1, %v1078
        %v1080 = vrot.slane %v1012, %v1079
        %v1084 = vlaneseq
        %v1085 = vshrl.u32 %v1084, 7
        %v1086 = vsub.s32 0, %v1085
        %v1087 = vrot.slane %v1014, %v1086
        %v1088 = vlaneseq
        %v1089 = vshrl.u32 %v1088, 7
        %v1090 = vsub.s32 1, %v1089
        %v1091 = vrot.slane %v1014, %v1090
        %v1095 = vlaneseq
        %v1096 = vshrl.u32 %v1095, 7
        %v1097 = vsub.s32 0, %v1096
        %v1098 = vrot.slane %v1016, %v1097
        %v1099 = vlaneseq
        %v1100 = vshrl.u32 %v1099, 7
        %v1101 = vsub.s32 1, %v1100
        %v1102 = vrot.slane %v1016, %v1101
        %v1105 = vsel %vm258, %v1021, %v1032
        %v1106 = vsel %vm258, %v1025, %v1036
        %v1107 = vsel %vm261, %v1105, %v1043
        %v1108 = vsel %vm261, %v1106, %v1047
        %v1109 = vsel %vm264, %v1107, %v1054
        %v1110 = vsel %vm264, %v1108, %v1058
        %v1111 = vsel %vm267, %v1109, %v1065
        %v1112 = vsel %vm267, %v1110, %v1069
        %v1113 = vsel %vm270, %v1111, %v1076
        %v1114 = vsel %vm270, %v1112, %v1080
        %v1115 = vsel %vm273, %v1113, %v1087
        %v1116 = vsel %vm273, %v1114, %v1091
        %v1117 = vsel %vm276, %v1115, %v1098
        %v1118 = vsel %vm276, %v1116, %v1102
        %1119 = vst [vmem:[%s152 + $0x70] sm:$0xff] %v1117
        %1120 = vst [vmem:[%s152 + $0x78] sm:$0xff] %v1118
        %s1121 = sand.u32 %s68, 1
        %s1122 = scalar_lea.sflag [#allocation4], %s1121
        %s1123 = sand.u32 %s68, 1
        %s1124 = smul.addr %s1123, 128
        %s1125 = scalar_lea.vmem [#allocation5], %s1124
        // Predicated region
        $region29: #{tpu_custom_call.1} parent=23 // pred_check
          %p1126 = pneg %p78
        $region30: #{tpu_custom_call.1} parent=23 // pred_check_branch
          %1128 = sbr.rel (%p1126) target = $region32
        $region31: #{tpu_custom_call.1} parent=23 // pred_region
          %s1129 = smul.u32 2, %s23
          %s1131 = ssub.s32 2048, 2048
          %1132 = vsyncadd %s1122, %s1131
          %s1133 = smul.addr %s22, 16
          %s1134 = sadd.s32 %s1129, %s1133
          %s1135 = smul.addr %s1134, 128
          %s1136 = scalar_lea.hbm %s1, %s1135
          %s1137 = sshll.u32 %s1125, 4
          %s1138 = int_to_ptr.vmem [resolvable:$true] %s1137
          %1143 = dma.vmem_to_hbm [thread:$0]  %s1138, 2048, %s1136, %s1122, 256, 256, 16
        $region32: #{tpu_custom_call.1} parent=23 // pred_fallthru
          _
      $region24: #{tpu_custom_call.1} parent=5 // pred_fallthru
        _
      %p1144 = scmp.le.s32.totalorder 2, %s13
      // Predicated region
      $region33: #{tpu_custom_call.1} parent=5 // pred_check
        %p1145 = pneg %p1144
      $region34: #{tpu_custom_call.1} parent=5 // pred_check_branch
        %1147 = sbr.rel (%p1145) target = $region36
      $region35: #{tpu_custom_call.1} parent=5 // pred_region
        %s1148 = ssub.s32 %s13, 2
        // Predicated region
        $region37: #{tpu_custom_call.1} parent=35 // pred_check
          %p1149 = pneg %p84
        $region38: #{tpu_custom_call.1} parent=35 // pred_check_branch
          %1151 = sbr.rel (%p1149) target = $region40
        $region39: #{tpu_custom_call.1} parent=35 // pred_region
          %s1152 = sand.u32 %s69, 1
          %s1153 = scalar_lea.sflag [#allocation4], %s1152
          %s1154 = sand.u32 %s69, 1
          %s1155 = smul.addr %s1154, 128
          %s1156 = scalar_lea.vmem [#allocation5], %s1155
          %1157 = dma.done %s1153, 2048
        $region40: #{tpu_custom_call.1} parent=35 // pred_fallthru
          _
      $region36: #{tpu_custom_call.1} parent=5 // pred_fallthru
        _
    $region6: #{tpu_custom_call.1} parent=1 // loop_footer
      %s17 = sadd.s32 1, %s13
    $region7: #{tpu_custom_call.1} parent=1 // loop_footer_branch
      %12 = sbr.rel target = $region3
    $region8: #{tpu_custom_call.1} parent=1 // loop_exit
      _
    %1158 = vsyncpa [#allocation3], 1
    %s1159 = scalar_lea.sflag [#allocation3], 1
    %1160 = vsyncpa %s1159, 1
    %1161 = vsyncpa [#allocation4], 1
    %s1162 = scalar_lea.sflag [#allocation4], 1
    %1163 = vsyncpa %s1162, 1

</llo_original>
